<compile_context>
chip_gen: v7x
topology: tpu7x:2x2x1
jax: 0.10.0
libtpu: 0.0.40
codegen_flags: <defaults>
</compile_context>

<pallas_src>
import functools

import jax
import jax.numpy as jnp
from jax.experimental import pallas as pl
from jax.experimental.pallas import tpu as pltpu

_LANE = 128        # lane-axis alignment (last dim)
_SUBLANE = 16      # sublane granule used for bf16-packed batch tiles
_MAX_K_TILE = 2048 # max feature chunk streamed per grid step
_NEG_BIG = -1e30   # bias for padded classes -> exp underflows to exactly 0


def _round_up(n: int, m: int) -> int:
    return ((n + m - 1) // m) * m


# ---------------------------------------------------------------------------
# Kernel: probs = softmax(x @ W + b), K-tiled with an f32 accumulator (P3).
# ---------------------------------------------------------------------------
def _predict_kernel(x_ref, w_ref, b_ref, probs_ref, acc_ref):
    """One (batch-tile, k-tile) grid step.

    x_ref:     (TB, TK) bf16  -- streamed batch/feature tile
    w_ref:     (TK, Cp) bf16  -- streamed feature chunk of the weights
    b_ref:     (1,  Cp) f32   -- resident bias (constant index_map)
    probs_ref: (TB, Cp) f32   -- output tile (constant across k)
    acc_ref:   (TB, Cp) f32   -- VMEM accumulator scratch
    """
    k = pl.program_id(1)

    @pl.when(k == 0)
    def _():
        acc_ref[...] = jnp.zeros_like(acc_ref)

    # MXU takes bf16 inputs natively; accumulate in f32.
    acc_ref[...] += jnp.dot(x_ref[...], w_ref[...],
                            preferred_element_type=jnp.float32)

    @pl.when(k == pl.num_programs(1) - 1)
    def _():
        logits = acc_ref[...] + b_ref[...]
        # Numerically-stable softmax in f32 on the accumulator.
        m = jnp.max(logits, axis=-1, keepdims=True)
        e = jnp.exp(logits - m)
        denom = jnp.sum(e, axis=-1, keepdims=True)
        # approx=True -> EUP vrcp in an otherwise idle VLIW slot.
        probs_ref[...] = (e * pl.reciprocal(denom, approx=True)).astype(probs_ref.dtype)


# ---------------------------------------------------------------------------
# Generation-aware VMEM budget / tile selection.
# ---------------------------------------------------------------------------
def _vmem_budget_and_limit():
    """Budget ~1/3 of physical VMEM; explicit vmem_limit_bytes; max batch tile."""
    try:
        cap = int(pltpu.get_tpu_info().vmem_capacity_bytes)
    except Exception:
        cap = 64 << 20  # conservative fallback: v7x-sized VMEM
    budget = max(8 << 20, min(cap // 3, 40 << 20))          # ~21 MiB v7x, 40 MiB v5e/v6e
    limit = int(max(32 << 20, min(cap // 2, 64 << 20)))     # explicit scoped-VMEM limit
    max_tile = 1024 if cap >= (100 << 20) else 512          # 1024 rows on 128-MiB parts
    return budget, limit, max_tile


def _pick_tiles(batch, feat_p, classes_p, budget_bytes, max_tile, num_cores=2):
    """Pick (tb, tk): tb = batch rows per tile, tk = feature chunk per grid step."""
    # --- K tile: whole feature dim if it fits, else the largest 128-multiple
    # divisor of feat_p that keeps the double-buffered bf16 W chunk small.
    tk = feat_p
    if tk > _MAX_K_TILE or 2 * tk * classes_p * 2 > budget_bytes // 2:
        tk = min(_MAX_K_TILE, feat_p)
        tk = (tk // _LANE) * _LANE
        while tk > _LANE and (feat_p % tk != 0
                              or 2 * tk * classes_p * 2 > budget_bytes // 2):
            tk -= _LANE
        tk = max(tk, _LANE)

    # --- Batch tile from the remaining VMEM budget.
    fixed = 2 * tk * classes_p * 2 + 2 * classes_p * 4        # W (2 bufs, bf16) + b (2 bufs, f32)
    per_row = 2 * tk * 2 + 2 * classes_p * 4 + classes_p * 4  # x (2 bufs) + out (2 bufs) + acc
    tb = (budget_bytes - fixed) // max(per_row, 1)
    tb = max(_SUBLANE, min(max_tile, tb))

    # Keep >= ~4 grid steps per TensorCore when the batch allows (pipelining).
    batch_p = _round_up(batch, _SUBLANE)
    rows_for_min_steps = _round_up(-(-batch_p // (4 * num_cores)), _SUBLANE)
    tb = min(tb, max(256, rows_for_min_steps))
    tb = min(tb, batch_p)                      # don't overshoot a small batch
    tb = max(_SUBLANE, (tb // _SUBLANE) * _SUBLANE)
    return int(tb), int(tk)


# ---------------------------------------------------------------------------
# Single jit covering cast/pad + pallas_call + output slice (fused, one dispatch).
# ---------------------------------------------------------------------------
@functools.partial(jax.jit,
                   static_argnames=("tb", "tk", "num_classes", "vmem_limit"))
def _predict_jit(x, w, b, *, tb, tk, num_classes, vmem_limit):
    batch, feat = x.shape
    feat_p, classes_p = w.shape
    batch_p = _round_up(batch, _SUBLANE)

    # Fused cast + pad (feature axis to Fp, batch axis only to the sublane granule).
    xp = jnp.pad(x.astype(jnp.bfloat16),
                 ((0, batch_p - batch), (0, feat_p - feat)))

    grid = (pl.cdiv(batch_p, tb), feat_p // tk)

    probs = pl.pallas_call(
        _predict_kernel,
        out_shape=jax.ShapeDtypeStruct((batch_p, classes_p), jnp.float32),
        grid_spec=pltpu.PrefetchScalarGridSpec(
            num_scalar_prefetch=0,
            grid=grid,
            in_specs=[
                pl.BlockSpec((tb, tk), lambda i, k: (i, k)),          # streamed x tile
                pl.BlockSpec((tk, classes_p), lambda i, k: (k, 0)),   # streamed W chunk
                pl.BlockSpec((1, classes_p), lambda i, k: (0, 0)),    # resident bias
            ],
            out_specs=pl.BlockSpec((tb, classes_p), lambda i, k: (i, 0)),
            scratch_shapes=[pltpu.VMEM((tb, classes_p), jnp.float32)],
        ),
        compiler_params=pltpu.CompilerParams(
            # Batch tiles independent -> shard across TensorCores; K is a reduction.
            dimension_semantics=("parallel", "arbitrary"),
            vmem_limit_bytes=vmem_limit,
        ),
    )(xp, w, b)

    # The valid-region slice fuses into this same jit (no extra HBM round trip).
    return probs[:batch, :num_classes]


# ---------------------------------------------------------------------------
# Synthetic base model + wrapper (forward-pass semantics of the PyTorch module).
# ---------------------------------------------------------------------------
class SyntheticBaseModel:
    """Deterministic stand-in for the wrapped `model` (linear classifier + softmax).

    Weights are stored bf16 and padded so feature/class axes are lane-dense
    (multiples of 128).  Padded classes get a -1e30 bias so their softmax
    probability is exactly zero and they drop out of the denominator.
    """

    def __init__(self, num_features: int, num_classes: int, key):
        self.num_features = num_features
        self.num_classes = num_classes
        self.feat_p = _round_up(num_features, _LANE)
        self.classes_p = _round_up(num_classes, _LANE)

        kw, kb = jax.random.split(key)
        w = jax.random.normal(kw, (num_features, num_classes), jnp.float32) * 0.05
        b = jax.random.normal(kb, (num_classes,), jnp.float32) * 0.01

        w_pad = jnp.zeros((self.feat_p, self.classes_p), jnp.float32)
        w_pad = w_pad.at[:num_features, :num_classes].set(w)
        b_pad = jnp.full((1, self.classes_p), _NEG_BIG, jnp.float32)
        b_pad = b_pad.at[0, :num_classes].set(b)

        self.w = w_pad.astype(jnp.bfloat16)   # (Fp, Cp) bf16, MXU-ready
        self.b = b_pad                        # (1,  Cp) f32
        # Unpadded views for reference checks.
        self.w_valid = self.w[:num_features, :num_classes]
        self.b_valid = b_pad[0, :num_classes]

    def predict(self, x):
        x = jnp.asarray(x, dtype=jnp.float32)
        batch, feat = x.shape
        assert feat == self.num_features
        budget, vmem_limit, max_tile = _vmem_budget_and_limit()
        tb, tk = _pick_tiles(batch, self.feat_p, self.classes_p, budget, max_tile)
        return _predict_jit(x, self.w, self.b, tb=tb, tk=tk,
                            num_classes=self.num_classes, vmem_limit=vmem_limit)


class ModelDirectWrapper:
    """JAX/Pallas equivalent of the PyTorch ModelDirectWrapper (pure pass-through)."""

    def __init__(self, model, args=None):
        self.model = model
        self.device = getattr(args, "device", None) if args is not None else None

    def __call__(self, x):
        return self.forward(x)

    def forward(self, x):
        # torch.no_grad() equivalent: run predict, return probs as f32
        # (already f32 from the kernel, so this cast is a no-op).
        probs = self.model.predict(x)
        return jnp.asarray(probs, dtype=jnp.float32)


if __name__ == "__main__":
    key = jax.random.PRNGKey(0)
    k_model, k_x = jax.random.split(key)

    # Small, deliberately unaligned feature/class counts to exercise padding;
    # batch=512 -> tb=256 -> >=2 batch grid steps (pipelined, megacore-shardable).
    BATCH, FEATURES, CLASSES = 512, 200, 100

    base_model = SyntheticBaseModel(FEATURES, CLASSES, k_model)
    wrapper = ModelDirectWrapper(base_model, args=None)

    x = jax.random.normal(k_x, (BATCH, FEATURES), dtype=jnp.float32)

    probs = jax.block_until_ready(wrapper(x))

    # Pure-JAX reference on the same bf16 weights/inputs.
    ref_logits = jnp.dot(x.astype(jnp.bfloat16), base_model.w_valid,
                         preferred_element_type=jnp.float32) + base_model.b_valid
    ref = jax.nn.softmax(ref_logits, axis=-1)

    assert probs.shape == (BATCH, CLASSES)
    assert bool(jnp.all(jnp.isfinite(probs)))
    assert jnp.allclose(probs, ref, atol=2e-3), "mismatch vs reference"
    assert jnp.allclose(jnp.sum(probs, axis=-1), 1.0, atol=2e-3)

    print("KERNEL_OK")
</pallas_src>

<mosaic_0001>
module attributes {stable_mosaic.version = 11 : i64} {
  func.func @_predict_kernel(%arg0: i32, %arg1: i32, %arg2: memref<256x256xbf16, #tpu.memory_space<vmem>>, %arg3: memref<256x128xbf16, #tpu.memory_space<vmem>>, %arg4: memref<1x128xf32, #tpu.memory_space<vmem>>, %arg5: memref<256x128xf32, #tpu.memory_space<vmem>>, %arg6: memref<256x128xf32, #tpu.memory_space<vmem>>) attributes {dimension_semantics = [#tpu.dimension_semantics<parallel>, #tpu.dimension_semantics<arbitrary>], iteration_bounds = array<i64: 2, 1>, scalar_prefetch = 0 : i64, scratch_operands = 1 : i64, tpu.core_type = #tpu.core_type<tc>, window_params = [{transform_indices = @transform_0, window_bounds = array<i64: 256, 256>}, {transform_indices = @transform_1, window_bounds = array<i64: 256, 128>}, {pipeline_mode = #tpu.pipeline_mode<synchronous>, transform_indices = @transform_2, window_bounds = array<i64: 1, 128>}, {transform_indices = @transform_3, window_bounds = array<i64: 256, 128>}]} {
    %c0_i32 = arith.constant 0 : i32
    %0 = arith.cmpi eq, %arg1, %c0_i32 : i32
    %1 = arith.extui %0 : i1 to i32
    %c0_i32_0 = arith.constant 0 : i32
    %2 = arith.cmpi ne, %1, %c0_i32_0 : i32
    scf.if %2 {
      %cst_10 = arith.constant 0.000000e+00 : f32
      %12 = vector.broadcast %cst_10 : f32 to vector<256x128xf32>
      %c0_11 = arith.constant 0 : index
      %c0_12 = arith.constant 0 : index
      %13 = vector.load %arg6[%c0_11, %c0_12] : memref<256x128xf32, #tpu.memory_space<vmem>>, vector<256x128xf32>
      tpu.vector_store %arg6[%c0_11, %c0_12], %12 {strides = array<i32>} : memref<256x128xf32, #tpu.memory_space<vmem>>, vector<256x128xf32>,
    } else {
    }
    %c0 = arith.constant 0 : index
    %c0_1 = arith.constant 0 : index
    %3 = vector.load %arg6[%c0, %c0_1] : memref<256x128xf32, #tpu.memory_space<vmem>>, vector<256x128xf32>
    %c0_2 = arith.constant 0 : index
    %c0_3 = arith.constant 0 : index
    %4 = vector.load %arg2[%c0_2, %c0_3] : memref<256x256xbf16, #tpu.memory_space<vmem>>, vector<256x256xbf16>
    %c0_4 = arith.constant 0 : index
    %c0_5 = arith.constant 0 : index
    %5 = vector.load %arg3[%c0_4, %c0_5] : memref<256x128xbf16, #tpu.memory_space<vmem>>, vector<256x128xbf16>
    %cst = arith.constant dense<0.000000e+00> : vector<256x128xf32>
    %6 = tpu.matmul %4, %5, %cst {dimension_numbers = #tpu.dot_dimension_numbers<[1], [0], [0], [1], [0, 0, 1, 1], [], []>} : vector<256x256xbf16>, vector<256x128xbf16>, vector<256x128xf32> -> vector<256x128xf32>
    %7 = arith.addf %3, %6 : vector<256x128xf32>
    %c0_6 = arith.constant 0 : index
    %c0_7 = arith.constant 0 : index
    %8 = vector.load %arg6[%c0_6, %c0_7] : memref<256x128xf32, #tpu.memory_space<vmem>>, vector<256x128xf32>
    tpu.vector_store %arg6[%c0_6, %c0_7], %7 {strides = array<i32>} : memref<256x128xf32, #tpu.memory_space<vmem>>, vector<256x128xf32>,
    %c0_i32_8 = arith.constant 0 : i32
    %9 = arith.cmpi eq, %arg1, %c0_i32_8 : i32
    %10 = arith.extui %9 : i1 to i32
    %c0_i32_9 = arith.constant 0 : i32
    %11 = arith.cmpi ne, %10, %c0_i32_9 : i32
    scf.if %11 {
      %c0_10 = arith.constant 0 : index
      %c0_11 = arith.constant 0 : index
      %12 = vector.load %arg6[%c0_10, %c0_11] : memref<256x128xf32, #tpu.memory_space<vmem>>, vector<256x128xf32>
      %c0_12 = arith.constant 0 : index
      %c0_13 = arith.constant 0 : index
      %13 = vector.load %arg4[%c0_12, %c0_13] : memref<1x128xf32, #tpu.memory_space<vmem>>, vector<1x128xf32>
      %14 = vector.broadcast %13 : vector<1x128xf32> to vector<256x128xf32>
      %15 = arith.addf %12, %14 : vector<256x128xf32>
      %cst_14 = arith.constant dense<0xFF800000> : vector<256xf32>
      %16 = vector.multi_reduction <maximumf>, %15, %cst_14 [1] : vector<256x128xf32> to vector<256xf32>
      %17 = vector.shape_cast %16 : vector<256xf32> to vector<256x1xf32>
      %18 = vector.broadcast %17 : vector<256x1xf32> to vector<256x128xf32>
      %19 = arith.subf %15, %18 : vector<256x128xf32>
      %20 = math.exp %19 : vector<256x128xf32>
      %cst_15 = arith.constant dense<0.000000e+00> : vector<256xf32>
      %21 = vector.multi_reduction <add>, %20, %cst_15 [1] : vector<256x128xf32> to vector<256xf32>
      %22 = vector.shape_cast %21 : vector<256xf32> to vector<256x1xf32>
      %23 = tpu.reciprocal %22 {approx = true} : vector<256x1xf32> -> vector<256x1xf32>
      %24 = vector.broadcast %23 : vector<256x1xf32> to vector<256x128xf32>
      %25 = arith.mulf %20, %24 : vector<256x128xf32>
      %c0_16 = arith.constant 0 : index
      %c0_17 = arith.constant 0 : index
      %26 = vector.load %arg5[%c0_16, %c0_17] : memref<256x128xf32, #tpu.memory_space<vmem>>, vector<256x128xf32>
      tpu.vector_store %arg5[%c0_16, %c0_17], %25 {strides = array<i32>} : memref<256x128xf32, #tpu.memory_space<vmem>>, vector<256x128xf32>,
    } else {
    }
    return
  }
  func.func @transform_0(%arg0: i32, %arg1: i32) -> (i32, i32) {
    %c0_i32 = arith.constant 0 : i32
    return %arg0, %arg1 : i32, i32
  }
  func.func @transform_1(%arg0: i32, %arg1: i32) -> (i32, i32) {
    %c0_i32 = arith.constant 0 : i32
    %c0_i32_0 = arith.constant 0 : i32
    return %arg1, %c0_i32 : i32, i32
  }
  func.func @transform_2(%arg0: i32, %arg1: i32) -> (i32, i32) {
    %c0_i32 = arith.constant 0 : i32
    %c0_i32_0 = arith.constant 0 : i32
    %c0_i32_1 = arith.constant 0 : i32
    return %c0_i32, %c0_i32_0 : i32, i32
  }
  func.func @transform_3(%arg0: i32, %arg1: i32) -> (i32, i32) {
    %c0_i32 = arith.constant 0 : i32
    %c0_i32_0 = arith.constant 0 : i32
    return %arg0, %c0_i32 : i32, i32
  }
}

</mosaic_0001>

<llo_original>
// kernel: _predict_jit.1
$region0: #{_predict_jit.1}
  #allocation0 [shape = 'u32[]', space=smem, size = 0x4, offset = 0x4, fixed_abs, tag = 'smem constant byte address 0x4 - core index']
  #allocation1 [shape = 'u32[144,128]{1,0:T(1,128)}', space=vmem, size = 0x12000, scoped, tag = 'internal scratch']
  #allocation2 [shape = 'f32[256,128]{1,0:T(8,128)}', space=vmem, size = 0x20000, scoped, tag = 'scratch operand']
  %s0 = inlined_call_operand.vmem [shape: bf16[512,256], index: 0, kind: input, shape index: {}]
  %s1 = inlined_call_operand.vmem [shape: bf16[256,128], index: 1, kind: input, shape index: {}]
  %s2 = inlined_call_operand.vmem [shape: f32[1,128], index: 2, kind: input, shape index: {}]
  %s3 = inlined_call_operand.vmem [shape: f32[512,128], index: 3, kind: output, shape index: {}]
  %s4 = sld [smem:[#allocation0]]
  $region53: #{_predict_jit.1} parent=0
    _
  %s6 = ssub.s32 1, %s4
  %s7 = scalar_select 0, %s6, %s4
  loop: start=0, step=1, limit=4
  $region2: #{_predict_jit.1} parent=0 // loop_pre_header
    _
  $region3: #{_predict_jit.1} parent=0 // loop_header
    %s9 = sphi 0, %s13
    %p10 = scmp.ge.s32.totalorder %s9, 4
    %s16 = sphi 0, %s28
    %s17 = sphi 0, %s24
    %s18 = sphi 0, %s16
    %s19 = sphi 0, %s17
    %s20 = sphi 0, %s18
    %s21 = sphi 0, %s19
    %s33 = sphi 0, %s35
    %s36 = sphi 0, %s33
    %s37 = sphi 0, %s36
    %s53 = sphi 0, %s37
    %s59 = sphi 0, %s61
    %s62 = sphi 0, %s59
    %s63 = sphi 0, %s62
    %s79 = sphi 0, %s63
    %s83 = sphi 0, %s83
    %s85 = sphi 0, %s83
    %s86 = sphi 0, %s85
    %s100 = sphi 0, %s86
    %s106 = sphi 0, %s108
    %s109 = sphi 0, %s106
    %s110 = sphi 0, %s109
    %s126 = sphi 0, %s110
  $region4: #{_predict_jit.1} parent=0 // loop_header_branch
    %12 = sbr.rel (%p10) target = $region8
  $region5: #{_predict_jit.1} parent=0 // loop_body
    %s14 = ssub.s32 %s9, 1
    %s15 = ssub.s32 %s9, 2
    %s22 = sadd.s32 1, %s17
    %p23 = scmp.ge.s32.totalorder %s22, 1
    %s24 = scalar_select %p23, 0, %s22
    %s25 = sadd.s32 1, %s16
    %s26 = scalar_select %p23, %s25, %s16
    %p27 = scmp.ge.s32.totalorder %s26, 2
    %s28 = scalar_select %p27, 0, %s26
    %s29 = ssub.s32 %s16, %s28
    %s30 = ssub.s32 %s17, %s24
    %s31 = sor.u32 %s29, %s30
    %p32 = scmp.eq.s32.totalorder %s31, 0
    %s34 = sadd.s32 %s33, 1
    %s35 = scalar_select %p32, %s33, %s34
    %p38 = pneg %p32
    %p39 = scmp.eq.s32.totalorder %s9, 1
    %p40 = por %p38, %p39
    %p41 = scmp.ne.s32.totalorder %s33, %s36
    %p42 = scmp.eq.s32.totalorder %s9, 0
    %p43 = por %p41, %p42
    %p44 = scmp.ne.s32.totalorder %s33, %s36
    %p45 = scmp.eq.s32.totalorder %s14, 1
    %p46 = por %p44, %p45
    %p47 = scmp.ne.s32.totalorder %s36, %s37
    %p48 = scmp.eq.s32.totalorder %s14, 0
    %p49 = por %p47, %p48
    %p50 = scmp.ne.s32.totalorder %s36, %s37
    %p51 = scmp.eq.s32.totalorder %s15, 1
    %p52 = por %p50, %p51
    %p54 = scmp.ne.s32.totalorder %s37, %s53
    %p55 = scmp.eq.s32.totalorder %s15, 0
    %p56 = por %p54, %p55
    %s57 = ssub.s32 %s17, %s24
    %p58 = scmp.eq.s32.totalorder %s57, 0
    %s60 = sadd.s32 %s59, 1
    %s61 = scalar_select %p58, %s59, %s60
    %p64 = pneg %p58
    %p65 = scmp.eq.s32.totalorder %s9, 1
    %p66 = por %p64, %p65
    %p67 = scmp.ne.s32.totalorder %s59, %s62
    %p68 = scmp.eq.s32.totalorder %s9, 0
    %p69 = por %p67, %p68
    %p70 = scmp.ne.s32.totalorder %s59, %s62
    %p71 = scmp.eq.s32.totalorder %s14, 1
    %p72 = por %p70, %p71
    %p73 = scmp.ne.s32.totalorder %s62, %s63
    %p74 = scmp.eq.s32.totalorder %s14, 0
    %p75 = por %p73, %p74
    %p76 = scmp.ne.s32.totalorder %s62, %s63
    %p77 = scmp.eq.s32.totalorder %s15, 1
    %p78 = por %p76, %p77
    %p80 = scmp.ne.s32.totalorder %s63, %s79
    %p81 = scmp.eq.s32.totalorder %s15, 0
    %p82 = por %p80, %p81
    %s84 = sadd.s32 %s83, 1
    %p87 = scmp.eq.s32.totalorder %s9, 1
    %p88 = scmp.ne.s32.totalorder %s83, %s85
    %p89 = scmp.eq.s32.totalorder %s9, 0
    %p90 = por %p88, %p89
    %p91 = scmp.ne.s32.totalorder %s83, %s85
    %p92 = scmp.eq.s32.totalorder %s14, 1
    %p93 = por %p91, %p92
    %p94 = scmp.ne.s32.totalorder %s85, %s86
    %p95 = scmp.eq.s32.totalorder %s14, 0
    %p96 = por %p94, %p95
    %p97 = scmp.ne.s32.totalorder %s85, %s86
    %p98 = scmp.eq.s32.totalorder %s15, 1
    %p99 = por %p97, %p98
    %p101 = scmp.ne.s32.totalorder %s86, %s100
    %p102 = scmp.eq.s32.totalorder %s15, 0
    %p103 = por %p101, %p102
    %s104 = ssub.s32 %s16, %s28
    %p105 = scmp.eq.s32.totalorder %s104, 0
    %s107 = sadd.s32 %s106, 1
    %s108 = scalar_select %p105, %s106, %s107
    %p111 = pneg %p105
    %p112 = scmp.eq.s32.totalorder %s9, 1
    %p113 = por %p111, %p112
    %p114 = scmp.ne.s32.totalorder %s106, %s109
    %p115 = scmp.eq.s32.totalorder %s9, 0
    %p116 = por %p114, %p115
    %p117 = scmp.ne.s32.totalorder %s106, %s109
    %p118 = scmp.eq.s32.totalorder %s14, 1
    %p119 = por %p117, %p118
    %p120 = scmp.ne.s32.totalorder %s109, %s110
    %p121 = scmp.eq.s32.totalorder %s14, 0
    %p122 = por %p120, %p121
    %p123 = scmp.ne.s32.totalorder %s109, %s110
    %p124 = scmp.eq.s32.totalorder %s15, 1
    %p125 = por %p123, %p124
    %p127 = scmp.ne.s32.totalorder %s110, %s126
    %p128 = scmp.eq.s32.totalorder %s15, 0
    %p129 = por %p127, %p128
    %p130 = scmp.le.s32.totalorder 1, %s9
    %p131 = scmp.lt.s32.totalorder %s9, 3
    %p132 = pnand %p130, %p131
    %p133 = pneg %p132
    // Predicated region
    $region9: #{_predict_jit.1} parent=5 // pred_check
      _
    $region10: #{_predict_jit.1} parent=5 // pred_check_branch
      %135 = sbr.rel (%p132) target = $region12
    $region11: #{_predict_jit.1} parent=5 // pred_region
      %s136 = ssub.s32 %s9, 1
      // Predicated region
      $region13: #{_predict_jit.1} parent=11 // pred_check
        %p137 = pneg %p75
      $region14: #{_predict_jit.1} parent=11 // pred_check_branch
        %139 = sbr.rel (%p137) target = $region16
      $region15: #{_predict_jit.1} parent=11 // pred_region
        %s140 = smul.u32 32, %s19
        %p141 = scmp.lt.s32.totalorder %s140, 31
        %s142 = scalar_select %p141, %s140, 31
        %s143 = smul.addr %s142, 4
        %s144 = scalar_lea.vmem %s1, %s143
        %s145 = smul.u32 32, %s19
      $region16: #{_predict_jit.1} parent=11 // pred_fallthru
        _
      // Predicated region
      $region17: #{_predict_jit.1} parent=11 // pred_check
        %p146 = pneg %p96
      $region18: #{_predict_jit.1} parent=11 // pred_check_branch
        %148 = sbr.rel (%p146) target = $region20
      $region19: #{_predict_jit.1} parent=11 // pred_region
        _
      $region20: #{_predict_jit.1} parent=11 // pred_fallthru
        _
    $region12: #{_predict_jit.1} parent=5 // pred_fallthru
      _
    %p149 = scmp.lt.s32.totalorder %s9, 2
    // Predicated region
    $region21: #{_predict_jit.1} parent=5 // pred_check
      %p150 = pneg %p149
    $region22: #{_predict_jit.1} parent=5 // pred_check_branch
      %152 = sbr.rel (%p150) target = $region24
    $region23: #{_predict_jit.1} parent=5 // pred_region
      // Predicated region
      $region25: #{_predict_jit.1} parent=23 // pred_check
        %p153 = pneg %p43
      $region26: #{_predict_jit.1} parent=23 // pred_check_branch
        %155 = sbr.rel (%p153) target = $region28
      $region27: #{_predict_jit.1} parent=23 // pred_region
        %s156 = smul.u32 32, %s16
        %s157 = smul.u32 2, %s17
        %p158 = scmp.lt.s32.totalorder %s156, 63
        %s159 = scalar_select %p158, %s156, 63
        %p160 = scmp.lt.s32.totalorder %s157, 1
        %s161 = scalar_select %p160, %s157, 1
        %s162 = smul.addr %s159, 2
        %s163 = sadd.s32 %s161, %s162
        %s164 = smul.addr %s163, 4
        %s165 = scalar_lea.vmem %s0, %s164
        %s166 = smul.u32 32, %s16
        %s167 = smul.u32 2, %s17
      $region28: #{_predict_jit.1} parent=23 // pred_fallthru
        _
    $region24: #{_predict_jit.1} parent=5 // pred_fallthru
      _
    %p168 = scmp.le.s32.totalorder 1, %s9
    %p169 = scmp.lt.s32.totalorder %s9, 3
    %p170 = pnand %p168, %p169
    %p171 = pneg %p170
    // Predicated region
    $region29: #{_predict_jit.1} parent=5 // pred_check
      _
    $region30: #{_predict_jit.1} parent=5 // pred_check_branch
      %173 = sbr.rel (%p170) target = $region32
    $region31: #{_predict_jit.1} parent=5 // pred_region
      %s174 = ssub.s32 %s9, 1
      %s175 = smul.u32 32, %s18
      %s176 = smul.u32 2, %s19
      %p177 = scmp.lt.s32.totalorder %s175, 63
      %s178 = scalar_select %p177, %s175, 63
      %p179 = scmp.lt.s32.totalorder %s176, 1
      %s180 = scalar_select %p179, %s176, 1
      %s181 = smul.addr %s178, 2
      %s182 = sadd.s32 %s180, %s181
      %s183 = smul.addr %s182, 4
      %s184 = scalar_lea.vmem %s0, %s183
      %p185 = pneg %p49
      %p186 = pneg %p46
      %s187 = smul.u32 32, %s19
      %p188 = scmp.lt.s32.totalorder %s187, 31
      %s189 = scalar_select %p188, %s187, 31
      %s190 = smul.addr %s189, 4
      %s191 = scalar_lea.vmem %s1, %s190
      %p192 = pneg %p75
      %p193 = pneg %p72
      %p194 = pneg %p96
      %p195 = pneg %p93
      %p196 = pneg %p122
      %p197 = pneg %p119
      %s198 = smul.u32 32, %s18
      %p199 = scmp.lt.s32.totalorder %s198, 63
      %s200 = scalar_select %p199, %s198, 63
      %s201 = smul.addr %s200, 8
      %s202 = scalar_lea.vmem %s3, %s201
      %s203 = smul.u32 32, %s18
      %s204 = smul.u32 2, %s19
      %p205 = scmp.lt.s32.totalorder %s203, 63
      %s206 = scalar_select %p205, %s203, 63
      %p207 = scmp.lt.s32.totalorder %s204, 1
      %s208 = scalar_select %p207, %s204, 1
      %s209 = smul.addr %s206, 2
      %s210 = sadd.s32 %s208, %s209
      %s211 = smul.addr %s210, 4
      %s212 = scalar_lea.vmem %s0, %s211
      %s213 = smul.u32 32, %s18
      %s214 = smul.u32 2, %s19
      %s215 = smul.u32 32, %s19
      %p216 = scmp.lt.s32.totalorder %s215, 31
      %s217 = scalar_select %p216, %s215, 31
      %s218 = smul.addr %s217, 4
      %s219 = scalar_lea.vmem %s1, %s218
      %s220 = smul.u32 32, %s19
      %s221 = smul.u32 32, %s18
      %p222 = scmp.lt.s32.totalorder %s221, 63
      %s223 = scalar_select %p222, %s221, 63
      %s224 = smul.addr %s223, 8
      %s225 = scalar_lea.vmem %s3, %s224
      %s226 = smul.u32 32, %s18
      %p228 = scmp.eq.s32.totalorder %s19, 0
      // Predicated region
      $region33: #{_predict_jit.1} parent=31 // pred_check
        %p229 = pneg %p228
      $region34: #{_predict_jit.1} parent=31 // pred_check_branch
        %231 = sbr.rel (%p229) target = $region36
      $region35: #{_predict_jit.1} parent=31 // pred_region
        %232 = vst [vmem:[#allocation2] sm:$0xff] 0.0
        %233 = vst [vmem:[#allocation2 + $0x8] sm:$0xff] 0.0
        %234 = vst [vmem:[#allocation2 + $0x10] sm:$0xff] 0.0
        %235 = vst [vmem:[#allocation2 + $0x18] sm:$0xff] 0.0
        %236 = vst [vmem:[#allocation2 + $0x20] sm:$0xff] 0.0
        %237 = vst [vmem:[#allocation2 + $0x28] sm:$0xff] 0.0
        %238 = vst [vmem:[#allocation2 + $0x30] sm:$0xff] 0.0
        %239 = vst [vmem:[#allocation2 + $0x38] sm:$0xff] 0.0
        %240 = vst [vmem:[#allocation2 + $0x40] sm:$0xff] 0.0
        %241 = vst [vmem:[#allocation2 + $0x48] sm:$0xff] 0.0
        %242 = vst [vmem:[#allocation2 + $0x50] sm:$0xff] 0.0
        %243 = vst [vmem:[#allocation2 + $0x58] sm:$0xff] 0.0
        %244 = vst [vmem:[#allocation2 + $0x60] sm:$0xff] 0.0
        %245 = vst [vmem:[#allocation2 + $0x68] sm:$0xff] 0.0
        %246 = vst [vmem:[#allocation2 + $0x70] sm:$0xff] 0.0
        %247 = vst [vmem:[#allocation2 + $0x78] sm:$0xff] 0.0
        %248 = vst [vmem:[#allocation2 + $0x80] sm:$0xff] 0.0
        %249 = vst [vmem:[#allocation2 + $0x88] sm:$0xff] 0.0
        %250 = vst [vmem:[#allocation2 + $0x90] sm:$0xff] 0.0
        %251 = vst [vmem:[#allocation2 + $0x98] sm:$0xff] 0.0
        %252 = vst [vmem:[#allocation2 + $0xa0] sm:$0xff] 0.0
        %253 = vst [vmem:[#allocation2 + $0xa8] sm:$0xff] 0.0
        %254 = vst [vmem:[#allocation2 + $0xb0] sm:$0xff] 0.0
        %255 = vst [vmem:[#allocation2 + $0xb8] sm:$0xff] 0.0
        %256 = vst [vmem:[#allocation2 + $0xc0] sm:$0xff] 0.0
        %257 = vst [vmem:[#allocation2 + $0xc8] sm:$0xff] 0.0
        %258 = vst [vmem:[#allocation2 + $0xd0] sm:$0xff] 0.0
        %259 = vst [vmem:[#allocation2 + $0xd8] sm:$0xff] 0.0
        %260 = vst [vmem:[#allocation2 + $0xe0] sm:$0xff] 0.0
        %261 = vst [vmem:[#allocation2 + $0xe8] sm:$0xff] 0.0
        %262 = vst [vmem:[#allocation2 + $0xf0] sm:$0xff] 0.0
        %263 = vst [vmem:[#allocation2 + $0xf8] sm:$0xff] 0.0
      $region36: #{_predict_jit.1} parent=31 // pred_fallthru
        _
      %v264 = vld [vmem:[#allocation2] sm:$0xff]
      %v265 = vld [vmem:[#allocation2 + $0x8] sm:$0xff]
      %v266 = vld [vmem:[#allocation2 + $0x10] sm:$0xff]
      %v267 = vld [vmem:[#allocation2 + $0x18] sm:$0xff]
      %v268 = vld [vmem:[#allocation2 + $0x20] sm:$0xff]
      %v269 = vld [vmem:[#allocation2 + $0x28] sm:$0xff]
      %v270 = vld [vmem:[#allocation2 + $0x30] sm:$0xff]
      %v271 = vld [vmem:[#allocation2 + $0x38] sm:$0xff]
      %v272 = vld [vmem:[#allocation2 + $0x40] sm:$0xff]
      %v273 = vld [vmem:[#allocation2 + $0x48] sm:$0xff]
      %v274 = vld [vmem:[#allocation2 + $0x50] sm:$0xff]
      %v275 = vld [vmem:[#allocation2 + $0x58] sm:$0xff]
      %v276 = vld [vmem:[#allocation2 + $0x60] sm:$0xff]
      %v277 = vld [vmem:[#allocation2 + $0x68] sm:$0xff]
      %v278 = vld [vmem:[#allocation2 + $0x70] sm:$0xff]
      %v279 = vld [vmem:[#allocation2 + $0x78] sm:$0xff]
      %v280 = vld [vmem:[#allocation2 + $0x80] sm:$0xff]
      %v281 = vld [vmem:[#allocation2 + $0x88] sm:$0xff]
      %v282 = vld [vmem:[#allocation2 + $0x90] sm:$0xff]
      %v283 = vld [vmem:[#allocation2 + $0x98] sm:$0xff]
      %v284 = vld [vmem:[#allocation2 + $0xa0] sm:$0xff]
      %v285 = vld [vmem:[#allocation2 + $0xa8] sm:$0xff]
      %v286 = vld [vmem:[#allocation2 + $0xb0] sm:$0xff]
      %v287 = vld [vmem:[#allocation2 + $0xb8] sm:$0xff]
      %v288 = vld [vmem:[#allocation2 + $0xc0] sm:$0xff]
      %v289 = vld [vmem:[#allocation2 + $0xc8] sm:$0xff]
      %v290 = vld [vmem:[#allocation2 + $0xd0] sm:$0xff]
      %v291 = vld [vmem:[#allocation2 + $0xd8] sm:$0xff]
      %v292 = vld [vmem:[#allocation2 + $0xe0] sm:$0xff]
      %v293 = vld [vmem:[#allocation2 + $0xe8] sm:$0xff]
      %v294 = vld [vmem:[#allocation2 + $0xf0] sm:$0xff]
      %v295 = vld [vmem:[#allocation2 + $0xf8] sm:$0xff]
      %v296 = vld [vmem:[%s212] sm:$0xff]
      %v297 = vld [vmem:[%s212 + $0x8] sm:$0xff]
      %v298 = vld [vmem:[%s212 + $0x10] sm:$0xff]
      %v299 = vld [vmem:[%s212 + $0x18] sm:$0xff]
      %v300 = vld [vmem:[%s212 + $0x20] sm:$0xff]
      %v301 = vld [vmem:[%s212 + $0x28] sm:$0xff]
      %v302 = vld [vmem:[%s212 + $0x30] sm:$0xff]
      %v303 = vld [vmem:[%s212 + $0x38] sm:$0xff]
      %v304 = vld [vmem:[%s212 + $0x40] sm:$0xff]
      %v305 = vld [vmem:[%s212 + $0x48] sm:$0xff]
      %v306 = vld [vmem:[%s212 + $0x50] sm:$0xff]
      %v307 = vld [vmem:[%s212 + $0x58] sm:$0xff]
      %v308 = vld [vmem:[%s212 + $0x60] sm:$0xff]
      %v309 = vld [vmem:[%s212 + $0x68] sm:$0xff]
      %v310 = vld [vmem:[%s212 + $0x70] sm:$0xff]
      %v311 = vld [vmem:[%s212 + $0x78] sm:$0xff]
      %v312 = vld [vmem:[%s212 + $0x80] sm:$0xff]
      %v313 = vld [vmem:[%s212 + $0x88] sm:$0xff]
      %v314 = vld [vmem:[%s212 + $0x90] sm:$0xff]
      %v315 = vld [vmem:[%s212 + $0x98] sm:$0xff]
      %v316 = vld [vmem:[%s212 + $0xa0] sm:$0xff]
      %v317 = vld [vmem:[%s212 + $0xa8] sm:$0xff]
      %v318 = vld [vmem:[%s212 + $0xb0] sm:$0xff]
      %v319 = vld [vmem:[%s212 + $0xb8] sm:$0xff]
      %v320 = vld [vmem:[%s212 + $0xc0] sm:$0xff]
      %v321 = vld [vmem:[%s212 + $0xc8] sm:$0xff]
      %v322 = vld [vmem:[%s212 + $0xd0] sm:$0xff]
      %v323 = vld [vmem:[%s212 + $0xd8] sm:$0xff]
      %v324 = vld [vmem:[%s212 + $0xe0] sm:$0xff]
      %v325 = vld [vmem:[%s212 + $0xe8] sm:$0xff]
      %v326 = vld [vmem:[%s212 + $0xf0] sm:$0xff]
      %v327 = vld [vmem:[%s212 + $0xf8] sm:$0xff]
      %v328 = vld [vmem:[%s219] sm:$0xf]
      %v329 = vld [vmem:[%s219 + $0x4] sm:$0xf]
      %v330 = vld [vmem:[%s219 + $0x8] sm:$0xf]
      %v331 = vld [vmem:[%s219 + $0xc] sm:$0xf]
      %v332 = vld [vmem:[%s219 + $0x10] sm:$0xf]
      %v333 = vld [vmem:[%s219 + $0x14] sm:$0xf]
      %v334 = vld [vmem:[%s219 + $0x18] sm:$0xf]
      %v335 = vld [vmem:[%s219 + $0x1c] sm:$0xf]
      %v336 = vld [vmem:[%s219 + $0x20] sm:$0xf]
      %v337 = vld [vmem:[%s219 + $0x24] sm:$0xf]
      %v338 = vld [vmem:[%s219 + $0x28] sm:$0xf]
      %v339 = vld [vmem:[%s219 + $0x2c] sm:$0xf]
      %v340 = vld [vmem:[%s219 + $0x30] sm:$0xf]
      %v341 = vld [vmem:[%s219 + $0x34] sm:$0xf]
      %v342 = vld [vmem:[%s219 + $0x38] sm:$0xf]
      %v343 = vld [vmem:[%s219 + $0x3c] sm:$0xf]
      %v344 = vld [vmem:[%s219 + $0x40] sm:$0xf]
      %v345 = vld [vmem:[%s219 + $0x44] sm:$0xf]
      %v346 = vld [vmem:[%s219 + $0x48] sm:$0xf]
      %v347 = vld [vmem:[%s219 + $0x4c] sm:$0xf]
      %v348 = vld [vmem:[%s219 + $0x50] sm:$0xf]
      %v349 = vld [vmem:[%s219 + $0x54] sm:$0xf]
      %v350 = vld [vmem:[%s219 + $0x58] sm:$0xf]
      %v351 = vld [vmem:[%s219 + $0x5c] sm:$0xf]
      %v352 = vld [vmem:[%s219 + $0x60] sm:$0xf]
      %v353 = vld [vmem:[%s219 + $0x64] sm:$0xf]
      %v354 = vld [vmem:[%s219 + $0x68] sm:$0xf]
      %v355 = vld [vmem:[%s219 + $0x6c] sm:$0xf]
      %v356 = vld [vmem:[%s219 + $0x70] sm:$0xf]
      %v357 = vld [vmem:[%s219 + $0x74] sm:$0xf]
      %v358 = vld [vmem:[%s219 + $0x78] sm:$0xf]
      %v359 = vld [vmem:[%s219 + $0x7c] sm:$0xf]
      %v392 = vunpack.c.l.b16 %v296
      %v393 = vunpack.c.h.b16 %v296
      %v394 = vunpack.c.l.b16 %v297
      %v395 = vunpack.c.h.b16 %v297
      %v396 = vunpack.c.l.b16 %v298
      %v397 = vunpack.c.h.b16 %v298
      %v398 = vunpack.c.l.b16 %v299
      %v399 = vunpack.c.h.b16 %v299
      %v400 = vunpack.c.l.b16 %v300
      %v401 = vunpack.c.h.b16 %v300
      %v402 = vunpack.c.l.b16 %v301
      %v403 = vunpack.c.h.b16 %v301
      %v404 = vunpack.c.l.b16 %v302
      %v405 = vunpack.c.h.b16 %v302
      %v406 = vunpack.c.l.b16 %v303
      %v407 = vunpack.c.h.b16 %v303
      %v408 = vunpack.c.l.b16 %v304
      %v409 = vunpack.c.h.b16 %v304
      %v410 = vunpack.c.l.b16 %v305
      %v411 = vunpack.c.h.b16 %v305
      %v412 = vunpack.c.l.b16 %v306
      %v413 = vunpack.c.h.b16 %v306
      %v414 = vunpack.c.l.b16 %v307
      %v415 = vunpack.c.h.b16 %v307
      %v416 = vunpack.c.l.b16 %v308
      %v417 = vunpack.c.h.b16 %v308
      %v418 = vunpack.c.l.b16 %v309
      %v419 = vunpack.c.h.b16 %v309
      %v420 = vunpack.c.l.b16 %v310
      %v421 = vunpack.c.h.b16 %v310
      %v422 = vunpack.c.l.b16 %v311
      %v423 = vunpack.c.h.b16 %v311
      %v424 = vunpack.c.l.b16 %v312
      %v425 = vunpack.c.h.b16 %v312
      %v426 = vunpack.c.l.b16 %v313
      %v427 = vunpack.c.h.b16 %v313
      %v428 = vunpack.c.l.b16 %v314
      %v429 = vunpack.c.h.b16 %v314
      %v430 = vunpack.c.l.b16 %v315
      %v431 = vunpack.c.h.b16 %v315
      %v432 = vunpack.c.l.b16 %v316
      %v433 = vunpack.c.h.b16 %v316
      %v434 = vunpack.c.l.b16 %v317
      %v435 = vunpack.c.h.b16 %v317
      %v436 = vunpack.c.l.b16 %v318
      %v437 = vunpack.c.h.b16 %v318
      %v438 = vunpack.c.l.b16 %v319
      %v439 = vunpack.c.h.b16 %v319
      %v440 = vunpack.c.l.b16 %v320
      %v441 = vunpack.c.h.b16 %v320
      %v442 = vunpack.c.l.b16 %v321
      %v443 = vunpack.c.h.b16 %v321
      %v444 = vunpack.c.l.b16 %v322
      %v445 = vunpack.c.h.b16 %v322
      %v446 = vunpack.c.l.b16 %v323
      %v447 = vunpack.c.h.b16 %v323
      %v448 = vunpack.c.l.b16 %v324
      %v449 = vunpack.c.h.b16 %v324
      %v450 = vunpack.c.l.b16 %v325
      %v451 = vunpack.c.h.b16 %v325
      %v452 = vunpack.c.l.b16 %v326
      %v453 = vunpack.c.h.b16 %v326
      %v454 = vunpack.c.l.b16 %v327
      %v455 = vunpack.c.h.b16 %v327
      %v456 = vpack.c.b16 %v394, %v392
      %v457 = vpack.c.b16 %v395, %v393
      %v458 = vpack.c.b16 %v398, %v396
      %v459 = vpack.c.b16 %v399, %v397
      %v460 = vpack.c.b16 %v402, %v400
      %v461 = vpack.c.b16 %v403, %v401
      %v462 = vpack.c.b16 %v406, %v404
      %v463 = vpack.c.b16 %v407, %v405
      %v464 = vpack.c.b16 %v410, %v408
      %v465 = vpack.c.b16 %v411, %v409
      %v466 = vpack.c.b16 %v414, %v412
      %v467 = vpack.c.b16 %v415, %v413
      %v468 = vpack.c.b16 %v418, %v416
      %v469 = vpack.c.b16 %v419, %v417
      %v470 = vpack.c.b16 %v422, %v420
      %v471 = vpack.c.b16 %v423, %v421
      %v472 = vpack.c.b16 %v426, %v424
      %v473 = vpack.c.b16 %v427, %v425
      %v474 = vpack.c.b16 %v430, %v428
      %v475 = vpack.c.b16 %v431, %v429
      %v476 = vpack.c.b16 %v434, %v432
      %v477 = vpack.c.b16 %v435, %v433
      %v478 = vpack.c.b16 %v438, %v436
      %v479 = vpack.c.b16 %v439, %v437
      %v480 = vpack.c.b16 %v442, %v440
      %v481 = vpack.c.b16 %v443, %v441
      %v482 = vpack.c.b16 %v446, %v444
      %v483 = vpack.c.b16 %v447, %v445
      %v484 = vpack.c.b16 %v450, %v448
      %v485 = vpack.c.b16 %v451, %v449
      %v486 = vpack.c.b16 %v454, %v452
      %v487 = vpack.c.b16 %v455, %v453
      %v552 = vunpack.c.l.b16 %v328
      %v553 = vunpack.c.l.b16 %v329
      %v554 = vunpack.c.l.b16 %v330
      %v555 = vunpack.c.l.b16 %v331
      %v556 = vunpack.c.l.b16 %v332
      %v557 = vunpack.c.l.b16 %v333
      %v558 = vunpack.c.l.b16 %v334
      %v559 = vunpack.c.l.b16 %v335
      %v560 = vunpack.c.l.b16 %v336
      %v561 = vunpack.c.l.b16 %v337
      %v562 = vunpack.c.l.b16 %v338
      %v563 = vunpack.c.l.b16 %v339
      %v564 = vunpack.c.l.b16 %v340
      %v565 = vunpack.c.l.b16 %v341
      %v566 = vunpack.c.l.b16 %v342
      %v567 = vunpack.c.l.b16 %v343
      %v568 = vunpack.c.l.b16 %v344
      %v569 = vunpack.c.l.b16 %v345
      %v570 = vunpack.c.l.b16 %v346
      %v571 = vunpack.c.l.b16 %v347
      %v572 = vunpack.c.l.b16 %v348
      %v573 = vunpack.c.l.b16 %v349
      %v574 = vunpack.c.l.b16 %v350
      %v575 = vunpack.c.l.b16 %v351
      %v576 = vunpack.c.l.b16 %v352
      %v577 = vunpack.c.l.b16 %v353
      %v578 = vunpack.c.l.b16 %v354
      %v579 = vunpack.c.l.b16 %v355
      %v580 = vunpack.c.l.b16 %v356
      %v581 = vunpack.c.l.b16 %v357
      %v582 = vunpack.c.l.b16 %v358
      %v583 = vunpack.c.l.b16 %v359
      %v584 = vpack.c.b16 %v553, %v552
      %v585 = vpack.c.b16 %v555, %v554
      %v586 = vpack.c.b16 %v557, %v556
      %v587 = vpack.c.b16 %v559, %v558
      %v588 = vpack.c.b16 %v561, %v560
      %v589 = vpack.c.b16 %v563, %v562
      %v590 = vpack.c.b16 %v565, %v564
      %v591 = vpack.c.b16 %v567, %v566
      %v592 = vpack.c.b16 %v569, %v568
      %v593 = vpack.c.b16 %v571, %v570
      %v594 = vpack.c.b16 %v573, %v572
      %v595 = vpack.c.b16 %v575, %v574
      %v596 = vpack.c.b16 %v577, %v576
      %v597 = vpack.c.b16 %v579, %v578
      %v598 = vpack.c.b16 %v581, %v580
      %v599 = vpack.c.b16 %v583, %v582
      %616 = vmatprep.subr.bf16.mxu0 0
      %617 = vmatpush1.bf16.msra.mxu0 %v584
      %618 = vmatprep.subr.bf16.mxu0 0
      %619 = vmatpush1.bf16.msra.mxu0 %v585
      %620 = vmatprep.subr.bf16.mxu0 0
      %621 = vmatpush1.bf16.msra.mxu0 %v586
      %622 = vmatprep.subr.bf16.mxu0 0
      %623 = vmatpush1.bf16.msra.mxu0 %v587
      %624 = vmatprep.subr.bf16.mxu0 0
      %625 = vmatpush1.bf16.msra.mxu0 %v588
      %626 = vmatprep.subr.bf16.mxu0 0
      %627 = vmatpush1.bf16.msra.mxu0 %v589
      %628 = vmatprep.subr.bf16.mxu0 0
      %629 = vmatpush1.bf16.msra.mxu0 %v590
      %630 = vmatprep.subr.bf16.mxu0 0
      %631 = vmatpush1.bf16.msra.mxu0 %v591
      %632 = vmatprep.subr.bf16.mxu0 0
      %633 = vmatpush1.bf16.msra.mxu0 %v592
      %634 = vmatprep.subr.bf16.mxu0 0
      %635 = vmatpush1.bf16.msra.mxu0 %v593
      %636 = vmatprep.subr.bf16.mxu0 0
      %637 = vmatpush1.bf16.msra.mxu0 %v594
      %638 = vmatprep.subr.bf16.mxu0 0
      %639 = vmatpush1.bf16.msra.mxu0 %v595
      %640 = vmatprep.subr.bf16.mxu0 0
      %641 = vmatpush1.bf16.msra.mxu0 %v596
      %642 = vmatprep.subr.bf16.mxu0 0
      %643 = vmatpush1.bf16.msra.mxu0 %v597
      %644 = vmatprep.subr.bf16.mxu0 0
      %645 = vmatpush1.bf16.msra.mxu0 %v598
      %646 = vmatprep.subr.bf16.mxu0 0
      %647 = vmatpush1.bf16.msra.mxu0 %v599
      %648 = vmatprep.mubr.bf16.mxu0 %v457
      %649 = vmatmul.mubr.bf16.gmra.mrb[0].mxu0 %v456
      %v650 = vpop.f32.mrb[0].mxu0
      %v651 = vadd.f32 0.0, %v650
      %v652 = vpop.f32.mrb[0].mxu0
      %v653 = vpop.f32.mrb[0].mxu0
      %v654 = vadd.f32 0.0, %v653
      %v655 = vpop.f32.mrb[0].mxu0
      %656 = vmatprep.mubr.bf16.mxu0 %v459
      %657 = vmatmul.mubr.bf16.gmra.mrb[0].mxu0 %v458
      %v658 = vpop.f32.mrb[0].mxu0
      %v659 = vadd.f32 0.0, %v658
      %v660 = vpop.f32.mrb[0].mxu0
      %v661 = vpop.f32.mrb[0].mxu0
      %v662 = vadd.f32 0.0, %v661
      %v663 = vpop.f32.mrb[0].mxu0
      %664 = vmatprep.mubr.bf16.mxu0 %v461
      %665 = vmatmul.mubr.bf16.gmra.mrb[0].mxu0 %v460
      %v666 = vpop.f32.mrb[0].mxu0
      %v667 = vadd.f32 0.0, %v666
      %v668 = vpop.f32.mrb[0].mxu0
      %v669 = vpop.f32.mrb[0].mxu0
      %v670 = vadd.f32 0.0, %v669
      %v671 = vpop.f32.mrb[0].mxu0
      %672 = vmatprep.mubr.bf16.mxu0 %v463
      %673 = vmatmul.mubr.bf16.gmra.mrb[0].mxu0 %v462
      %v674 = vpop.f32.mrb[0].mxu0
      %v675 = vadd.f32 0.0, %v674
      %v676 = vpop.f32.mrb[0].mxu0
      %v677 = vpop.f32.mrb[0].mxu0
      %v678 = vadd.f32 0.0, %v677
      %v679 = vpop.f32.mrb[0].mxu0
      %680 = vmatprep.mubr.bf16.mxu0 %v465
      %681 = vmatmul.mubr.bf16.gmra.mrb[0].mxu0 %v464
      %v682 = vpop.f32.mrb[0].mxu0
      %v683 = vadd.f32 0.0, %v682
      %v684 = vpop.f32.mrb[0].mxu0
      %v685 = vpop.f32.mrb[0].mxu0
      %v686 = vadd.f32 0.0, %v685
      %v687 = vpop.f32.mrb[0].mxu0
      %688 = vmatprep.mubr.bf16.mxu0 %v467
      %689 = vmatmul.mubr.bf16.gmra.mrb[0].mxu0 %v466
      %v690 = vpop.f32.mrb[0].mxu0
      %v691 = vadd.f32 0.0, %v690
      %v692 = vpop.f32.mrb[0].mxu0
      %v693 = vpop.f32.mrb[0].mxu0
      %v694 = vadd.f32 0.0, %v693
      %v695 = vpop.f32.mrb[0].mxu0
      %696 = vmatprep.mubr.bf16.mxu0 %v469
      %697 = vmatmul.mubr.bf16.gmra.mrb[0].mxu0 %v468
      %v698 = vpop.f32.mrb[0].mxu0
      %v699 = vadd.f32 0.0, %v698
      %v700 = vpop.f32.mrb[0].mxu0
      %v701 = vpop.f32.mrb[0].mxu0
      %v702 = vadd.f32 0.0, %v701
      %v703 = vpop.f32.mrb[0].mxu0
      %704 = vmatprep.mubr.bf16.mxu0 %v471
      %705 = vmatmul.mubr.bf16.gmra.mrb[0].mxu0 %v470
      %v706 = vpop.f32.mrb[0].mxu0
      %v707 = vadd.f32 0.0, %v706
      %v708 = vpop.f32.mrb[0].mxu0
      %v709 = vpop.f32.mrb[0].mxu0
      %v710 = vadd.f32 0.0, %v709
      %v711 = vpop.f32.mrb[0].mxu0
      %712 = vmatprep.mubr.bf16.mxu0 %v473
      %713 = vmatmul.mubr.bf16.gmra.mrb[0].mxu0 %v472
      %v714 = vpop.f32.mrb[0].mxu0
      %v715 = vadd.f32 0.0, %v714
      %v716 = vpop.f32.mrb[0].mxu0
      %v717 = vpop.f32.mrb[0].mxu0
      %v718 = vadd.f32 0.0, %v717
      %v719 = vpop.f32.mrb[0].mxu0
      %720 = vmatprep.mubr.bf16.mxu0 %v475
      %721 = vmatmul.mubr.bf16.gmra.mrb[0].mxu0 %v474
      %v722 = vpop.f32.mrb[0].mxu0
      %v723 = vadd.f32 0.0, %v722
      %v724 = vpop.f32.mrb[0].mxu0
      %v725 = vpop.f32.mrb[0].mxu0
      %v726 = vadd.f32 0.0, %v725
      %v727 = vpop.f32.mrb[0].mxu0
      %728 = vmatprep.mubr.bf16.mxu0 %v477
      %729 = vmatmul.mubr.bf16.gmra.mrb[0].mxu0 %v476
      %v730 = vpop.f32.mrb[0].mxu0
      %v731 = vadd.f32 0.0, %v730
      %v732 = vpop.f32.mrb[0].mxu0
      %v733 = vpop.f32.mrb[0].mxu0
      %v734 = vadd.f32 0.0, %v733
      %v735 = vpop.f32.mrb[0].mxu0
      %736 = vmatprep.mubr.bf16.mxu0 %v479
      %737 = vmatmul.mubr.bf16.gmra.mrb[0].mxu0 %v478
      %v738 = vpop.f32.mrb[0].mxu0
      %v739 = vadd.f32 0.0, %v738
      %v740 = vpop.f32.mrb[0].mxu0
      %v741 = vpop.f32.mrb[0].mxu0
      %v742 = vadd.f32 0.0, %v741
      %v743 = vpop.f32.mrb[0].mxu0
      %744 = vmatprep.mubr.bf16.mxu0 %v481
      %745 = vmatmul.mubr.bf16.gmra.mrb[0].mxu0 %v480
      %v746 = vpop.f32.mrb[0].mxu0
      %v747 = vadd.f32 0.0, %v746
      %v748 = vpop.f32.mrb[0].mxu0
      %v749 = vpop.f32.mrb[0].mxu0
      %v750 = vadd.f32 0.0, %v749
      %v751 = vpop.f32.mrb[0].mxu0
      %752 = vmatprep.mubr.bf16.mxu0 %v483
      %753 = vmatmul.mubr.bf16.gmra.mrb[0].mxu0 %v482
      %v754 = vpop.f32.mrb[0].mxu0
      %v755 = vadd.f32 0.0, %v754
      %v756 = vpop.f32.mrb[0].mxu0
      %v757 = vpop.f32.mrb[0].mxu0
      %v758 = vadd.f32 0.0, %v757
      %v759 = vpop.f32.mrb[0].mxu0
      %760 = vmatprep.mubr.bf16.mxu0 %v485
      %761 = vmatmul.mubr.bf16.gmra.mrb[0].mxu0 %v484
      %v762 = vpop.f32.mrb[0].mxu0
      %v763 = vadd.f32 0.0, %v762
      %v764 = vpop.f32.mrb[0].mxu0
      %v765 = vpop.f32.mrb[0].mxu0
      %v766 = vadd.f32 0.0, %v765
      %v767 = vpop.f32.mrb[0].mxu0
      %768 = vmatprep.mubr.bf16.mxu0 %v487
      %769 = vmatmul.mubr.bf16.gmra.mrb[0].mxu0 %v486
      %v770 = vpop.f32.mrb[0].mxu0
      %v771 = vadd.f32 0.0, %v770
      %v772 = vpop.f32.mrb[0].mxu0
      %v773 = vpop.f32.mrb[0].mxu0
      %v774 = vadd.f32 0.0, %v773
      %v775 = vpop.f32.mrb[0].mxu0
      %776 = vdwg.mxu0
      %v777 = vadd.f32 %v264, %v651
      %v778 = vadd.f32 %v265, %v654
      %v779 = vadd.f32 %v266, %v659
      %v780 = vadd.f32 %v267, %v662
      %v781 = vadd.f32 %v268, %v667
      %v782 = vadd.f32 %v269, %v670
      %v783 = vadd.f32 %v270, %v675
      %v784 = vadd.f32 %v271, %v678
      %v785 = vadd.f32 %v272, %v683
      %v786 = vadd.f32 %v273, %v686
      %v787 = vadd.f32 %v274, %v691
      %v788 = vadd.f32 %v275, %v694
      %v789 = vadd.f32 %v276, %v699
      %v790 = vadd.f32 %v277, %v702
      %v791 = vadd.f32 %v278, %v707
      %v792 = vadd.f32 %v279, %v710
      %v793 = vadd.f32 %v280, %v715
      %v794 = vadd.f32 %v281, %v718
      %v795 = vadd.f32 %v282, %v723
      %v796 = vadd.f32 %v283, %v726
      %v797 = vadd.f32 %v284, %v731
      %v798 = vadd.f32 %v285, %v734
      %v799 = vadd.f32 %v286, %v739
      %v800 = vadd.f32 %v287, %v742
      %v801 = vadd.f32 %v288, %v747
      %v802 = vadd.f32 %v289, %v750
      %v803 = vadd.f32 %v290, %v755
      %v804 = vadd.f32 %v291, %v758
      %v805 = vadd.f32 %v292, %v763
      %v806 = vadd.f32 %v293, %v766
      %v807 = vadd.f32 %v294, %v771
      %v808 = vadd.f32 %v295, %v774
      %809 = vst [vmem:[#allocation2] sm:$0xff] %v777
      %810 = vst [vmem:[#allocation2 + $0x8] sm:$0xff] %v778
      %811 = vst [vmem:[#allocation2 + $0x10] sm:$0xff] %v779
      %812 = vst [vmem:[#allocation2 + $0x18] sm:$0xff] %v780
      %813 = vst [vmem:[#allocation2 + $0x20] sm:$0xff] %v781
      %814 = vst [vmem:[#allocation2 + $0x28] sm:$0xff] %v782
      %815 = vst [vmem:[#allocation2 + $0x30] sm:$0xff] %v783
      %816 = vst [vmem:[#allocation2 + $0x38] sm:$0xff] %v784
      %817 = vst [vmem:[#allocation2 + $0x40] sm:$0xff] %v785
      %818 = vst [vmem:[#allocation2 + $0x48] sm:$0xff] %v786
      %819 = vst [vmem:[#allocation2 + $0x50] sm:$0xff] %v787
      %820 = vst [vmem:[#allocation2 + $0x58] sm:$0xff] %v788
      %821 = vst [vmem:[#allocation2 + $0x60] sm:$0xff] %v789
      %822 = vst [vmem:[#allocation2 + $0x68] sm:$0xff] %v790
      %823 = vst [vmem:[#allocation2 + $0x70] sm:$0xff] %v791
      %824 = vst [vmem:[#allocation2 + $0x78] sm:$0xff] %v792
      %825 = vst [vmem:[#allocation2 + $0x80] sm:$0xff] %v793
      %826 = vst [vmem:[#allocation2 + $0x88] sm:$0xff] %v794
      %827 = vst [vmem:[#allocation2 + $0x90] sm:$0xff] %v795
      %828 = vst [vmem:[#allocation2 + $0x98] sm:$0xff] %v796
      %829 = vst [vmem:[#allocation2 + $0xa0] sm:$0xff] %v797
      %830 = vst [vmem:[#allocation2 + $0xa8] sm:$0xff] %v798
      %831 = vst [vmem:[#allocation2 + $0xb0] sm:$0xff] %v799
      %832 = vst [vmem:[#allocation2 + $0xb8] sm:$0xff] %v800
      %833 = vst [vmem:[#allocation2 + $0xc0] sm:$0xff] %v801
      %834 = vst [vmem:[#allocation2 + $0xc8] sm:$0xff] %v802
      %835 = vst [vmem:[#allocation2 + $0xd0] sm:$0xff] %v803
      %836 = vst [vmem:[#allocation2 + $0xd8] sm:$0xff] %v804
      %837 = vst [vmem:[#allocation2 + $0xe0] sm:$0xff] %v805
      %838 = vst [vmem:[#allocation2 + $0xe8] sm:$0xff] %v806
      %839 = vst [vmem:[#allocation2 + $0xf0] sm:$0xff] %v807
      %840 = vst [vmem:[#allocation2 + $0xf8] sm:$0xff] %v808
      // Predicated region
      $region37: #{_predict_jit.1} parent=31 // pred_check
        %p841 = pneg %p228
      $region38: #{_predict_jit.1} parent=31 // pred_check_branch
        %843 = sbr.rel (%p841) target = $region40
      $region39: #{_predict_jit.1} parent=31 // pred_region
        %v844 = vld [vmem:[#allocation2] sm:$0xff]
        %v845 = vld [vmem:[#allocation2 + $0x8] sm:$0xff]
        %v846 = vld [vmem:[#allocation2 + $0x10] sm:$0xff]
        %v847 = vld [vmem:[#allocation2 + $0x18] sm:$0xff]
        %v848 = vld [vmem:[#allocation2 + $0x20] sm:$0xff]
        %v849 = vld [vmem:[#allocation2 + $0x28] sm:$0xff]
        %v850 = vld [vmem:[#allocation2 + $0x30] sm:$0xff]
        %v851 = vld [vmem:[#allocation2 + $0x38] sm:$0xff]
        %v852 = vld [vmem:[#allocation2 + $0x40] sm:$0xff]
        %v853 = vld [vmem:[#allocation2 + $0x48] sm:$0xff]
        %v854 = vld [vmem:[#allocation2 + $0x50] sm:$0xff]
        %v855 = vld [vmem:[#allocation2 + $0x58] sm:$0xff]
        %v856 = vld [vmem:[#allocation2 + $0x60] sm:$0xff]
        %v857 = vld [vmem:[#allocation2 + $0x68] sm:$0xff]
        %v858 = vld [vmem:[#allocation2 + $0x70] sm:$0xff]
        %v859 = vld [vmem:[#allocation2 + $0x78] sm:$0xff]
        %v860 = vld [vmem:[#allocation2 + $0x80] sm:$0xff]
        %v861 = vld [vmem:[#allocation2 + $0x88] sm:$0xff]
        %v862 = vld [vmem:[#allocation2 + $0x90] sm:$0xff]
        %v863 = vld [vmem:[#allocation2 + $0x98] sm:$0xff]
        %v864 = vld [vmem:[#allocation2 + $0xa0] sm:$0xff]
        %v865 = vld [vmem:[#allocation2 + $0xa8] sm:$0xff]
        %v866 = vld [vmem:[#allocation2 + $0xb0] sm:$0xff]
        %v867 = vld [vmem:[#allocation2 + $0xb8] sm:$0xff]
        %v868 = vld [vmem:[#allocation2 + $0xc0] sm:$0xff]
        %v869 = vld [vmem:[#allocation2 + $0xc8] sm:$0xff]
        %v870 = vld [vmem:[#allocation2 + $0xd0] sm:$0xff]
        %v871 = vld [vmem:[#allocation2 + $0xd8] sm:$0xff]
        %v872 = vld [vmem:[#allocation2 + $0xe0] sm:$0xff]
        %v873 = vld [vmem:[#allocation2 + $0xe8] sm:$0xff]
        %v874 = vld [vmem:[#allocation2 + $0xf0] sm:$0xff]
        %v875 = vld [vmem:[#allocation2 + $0xf8] sm:$0xff]
        %v876 = vld [vmem:[%s2] sm:$0x1]
        %v878 = vlaneseq
        %v879 = vshrl.u32 %v878, 7
        %v880 = vsub.s32 0, %v879
        %v881 = vrot.slane %v876, %v880
        %v883 = vadd.f32 %v844, %v881
        %v884 = vadd.f32 %v845, %v881
        %v885 = vadd.f32 %v846, %v881
        %v886 = vadd.f32 %v847, %v881
        %v887 = vadd.f32 %v848, %v881
        %v888 = vadd.f32 %v849, %v881
        %v889 = vadd.f32 %v850, %v881
        %v890 = vadd.f32 %v851, %v881
        %v891 = vadd.f32 %v852, %v881
        %v892 = vadd.f32 %v853, %v881
        %v893 = vadd.f32 %v854, %v881
        %v894 = vadd.f32 %v855, %v881
        %v895 = vadd.f32 %v856, %v881
        %v896 = vadd.f32 %v857, %v881
        %v897 = vadd.f32 %v858, %v881
        %v898 = vadd.f32 %v859, %v881
        %v899 = vadd.f32 %v860, %v881
        %v900 = vadd.f32 %v861, %v881
        %v901 = vadd.f32 %v862, %v881
        %v902 = vadd.f32 %v863, %v881
        %v903 = vadd.f32 %v864, %v881
        %v904 = vadd.f32 %v865, %v881
        %v905 = vadd.f32 %v866, %v881
        %v906 = vadd.f32 %v867, %v881
        %v907 = vadd.f32 %v868, %v881
        %v908 = vadd.f32 %v869, %v881
        %v909 = vadd.f32 %v870, %v881
        %v910 = vadd.f32 %v871, %v881
        %v911 = vadd.f32 %v872, %v881
        %v912 = vadd.f32 %v873, %v881
        %v913 = vadd.f32 %v874, %v881
        %v914 = vadd.f32 %v875, %v881
        %915 = vmax.xlane.f32.xlu0 %v883
        %v916 = vpop.xlane.xlu0 %915
        %917 = vmax.xlane.f32.xlu0 %v884
        %v918 = vpop.xlane.xlu0 %917
        %919 = vmax.xlane.f32.xlu0 %v885
        %v920 = vpop.xlane.xlu0 %919
        %921 = vmax.xlane.f32.xlu0 %v886
        %v922 = vpop.xlane.xlu0 %921
        %923 = vmax.xlane.f32.xlu0 %v887
        %v924 = vpop.xlane.xlu0 %923
        %925 = vmax.xlane.f32.xlu0 %v888
        %v926 = vpop.xlane.xlu0 %925
        %927 = vmax.xlane.f32.xlu0 %v889
        %v928 = vpop.xlane.xlu0 %927
        %929 = vmax.xlane.f32.xlu0 %v890
        %v930 = vpop.xlane.xlu0 %929
        %931 = vmax.xlane.f32.xlu0 %v891
        %v932 = vpop.xlane.xlu0 %931
        %933 = vmax.xlane.f32.xlu0 %v892
        %v934 = vpop.xlane.xlu0 %933
        %935 = vmax.xlane.f32.xlu0 %v893
        %v936 = vpop.xlane.xlu0 %935
        %937 = vmax.xlane.f32.xlu0 %v894
        %v938 = vpop.xlane.xlu0 %937
        %939 = vmax.xlane.f32.xlu0 %v895
        %v940 = vpop.xlane.xlu0 %939
        %941 = vmax.xlane.f32.xlu0 %v896
        %v942 = vpop.xlane.xlu0 %941
        %943 = vmax.xlane.f32.xlu0 %v897
        %v944 = vpop.xlane.xlu0 %943
        %945 = vmax.xlane.f32.xlu0 %v898
        %v946 = vpop.xlane.xlu0 %945
        %947 = vmax.xlane.f32.xlu0 %v899
        %v948 = vpop.xlane.xlu0 %947
        %949 = vmax.xlane.f32.xlu0 %v900
        %v950 = vpop.xlane.xlu0 %949
        %951 = vmax.xlane.f32.xlu0 %v901
        %v952 = vpop.xlane.xlu0 %951
        %953 = vmax.xlane.f32.xlu0 %v902
        %v954 = vpop.xlane.xlu0 %953
        %955 = vmax.xlane.f32.xlu0 %v903
        %v956 = vpop.xlane.xlu0 %955
        %957 = vmax.xlane.f32.xlu0 %v904
        %v958 = vpop.xlane.xlu0 %957
        %959 = vmax.xlane.f32.xlu0 %v905
        %v960 = vpop.xlane.xlu0 %959
        %961 = vmax.xlane.f32.xlu0 %v906
        %v962 = vpop.xlane.xlu0 %961
        %963 = vmax.xlane.f32.xlu0 %v907
        %v964 = vpop.xlane.xlu0 %963
        %965 = vmax.xlane.f32.xlu0 %v908
        %v966 = vpop.xlane.xlu0 %965
        %967 = vmax.xlane.f32.xlu0 %v909
        %v968 = vpop.xlane.xlu0 %967
        %969 = vmax.xlane.f32.xlu0 %v910
        %v970 = vpop.xlane.xlu0 %969
        %971 = vmax.xlane.f32.xlu0 %v911
        %v972 = vpop.xlane.xlu0 %971
        %973 = vmax.xlane.f32.xlu0 %v912
        %v974 = vpop.xlane.xlu0 %973
        %975 = vmax.xlane.f32.xlu0 %v913
        %v976 = vpop.xlane.xlu0 %975
        %977 = vmax.xlane.f32.xlu0 %v914
        %v978 = vpop.xlane.xlu0 %977
        %v979 = vsub.f32 %v883, %v916
        %v980 = vsub.f32 %v884, %v918
        %v981 = vsub.f32 %v885, %v920
        %v982 = vsub.f32 %v886, %v922
        %v983 = vsub.f32 %v887, %v924
        %v984 = vsub.f32 %v888, %v926
        %v985 = vsub.f32 %v889, %v928
        %v986 = vsub.f32 %v890, %v930
        %v987 = vsub.f32 %v891, %v932
        %v988 = vsub.f32 %v892, %v934
        %v989 = vsub.f32 %v893, %v936
        %v990 = vsub.f32 %v894, %v938
        %v991 = vsub.f32 %v895, %v940
        %v992 = vsub.f32 %v896, %v942
        %v993 = vsub.f32 %v897, %v944
        %v994 = vsub.f32 %v898, %v946
        %v995 = vsub.f32 %v899, %v948
        %v996 = vsub.f32 %v900, %v950
        %v997 = vsub.f32 %v901, %v952
        %v998 = vsub.f32 %v902, %v954
        %v999 = vsub.f32 %v903, %v956
        %v1000 = vsub.f32 %v904, %v958
        %v1001 = vsub.f32 %v905, %v960
        %v1002 = vsub.f32 %v906, %v962
        %v1003 = vsub.f32 %v907, %v964
        %v1004 = vsub.f32 %v908, %v966
        %v1005 = vsub.f32 %v909, %v968
        %v1006 = vsub.f32 %v910, %v970
        %v1007 = vsub.f32 %v911, %v972
        %v1008 = vsub.f32 %v912, %v974
        %v1009 = vsub.f32 %v913, %v976
        %v1010 = vsub.f32 %v914, %v978
        %v1011 = vmul.f32 %v979, 1.442695
        %v1012 = vpow.pop %v1011
        %v1013 = vmul.f32 %v980, 1.442695
        %v1014 = vpow.pop %v1013
        %v1015 = vmul.f32 %v981, 1.442695
        %v1016 = vpow.pop %v1015
        %v1017 = vmul.f32 %v982, 1.442695
        %v1018 = vpow.pop %v1017
        %v1019 = vmul.f32 %v983, 1.442695
        %v1020 = vpow.pop %v1019
        %v1021 = vmul.f32 %v984, 1.442695
        %v1022 = vpow.pop %v1021
        %v1023 = vmul.f32 %v985, 1.442695
        %v1024 = vpow.pop %v1023
        %v1025 = vmul.f32 %v986, 1.442695
        %v1026 = vpow.pop %v1025
        %v1027 = vmul.f32 %v987, 1.442695
        %v1028 = vpow.pop %v1027
        %v1029 = vmul.f32 %v988, 1.442695
        %v1030 = vpow.pop %v1029
        %v1031 = vmul.f32 %v989, 1.442695
        %v1032 = vpow.pop %v1031
        %v1033 = vmul.f32 %v990, 1.442695
        %v1034 = vpow.pop %v1033
        %v1035 = vmul.f32 %v991, 1.442695
        %v1036 = vpow.pop %v1035
        %v1037 = vmul.f32 %v992, 1.442695
        %v1038 = vpow.pop %v1037
        %v1039 = vmul.f32 %v993, 1.442695
        %v1040 = vpow.pop %v1039
        %v1041 = vmul.f32 %v994, 1.442695
        %v1042 = vpow.pop %v1041
        %v1043 = vmul.f32 %v995, 1.442695
        %v1044 = vpow.pop %v1043
        %v1045 = vmul.f32 %v996, 1.442695
        %v1046 = vpow.pop %v1045
        %v1047 = vmul.f32 %v997, 1.442695
        %v1048 = vpow.pop %v1047
        %v1049 = vmul.f32 %v998, 1.442695
        %v1050 = vpow.pop %v1049
        %v1051 = vmul.f32 %v999, 1.442695
        %v1052 = vpow.pop %v1051
        %v1053 = vmul.f32 %v1000, 1.442695
        %v1054 = vpow.pop %v1053
        %v1055 = vmul.f32 %v1001, 1.442695
        %v1056 = vpow.pop %v1055
        %v1057 = vmul.f32 %v1002, 1.442695
        %v1058 = vpow.pop %v1057
        %v1059 = vmul.f32 %v1003, 1.442695
        %v1060 = vpow.pop %v1059
        %v1061 = vmul.f32 %v1004, 1.442695
        %v1062 = vpow.pop %v1061
        %v1063 = vmul.f32 %v1005, 1.442695
        %v1064 = vpow.pop %v1063
        %v1065 = vmul.f32 %v1006, 1.442695
        %v1066 = vpow.pop %v1065
        %v1067 = vmul.f32 %v1007, 1.442695
        %v1068 = vpow.pop %v1067
        %v1069 = vmul.f32 %v1008, 1.442695
        %v1070 = vpow.pop %v1069
        %v1071 = vmul.f32 %v1009, 1.442695
        %v1072 = vpow.pop %v1071
        %v1073 = vmul.f32 %v1010, 1.442695
        %v1074 = vpow.pop %v1073
        %1075 = vadd.xlane.f32.xlu0 %v1012
        %v1076 = vpop.xlane.xlu0 %1075
        %1077 = vadd.xlane.f32.xlu0 %v1014
        %v1078 = vpop.xlane.xlu0 %1077
        %1079 = vadd.xlane.f32.xlu0 %v1016
        %v1080 = vpop.xlane.xlu0 %1079
        %1081 = vadd.xlane.f32.xlu0 %v1018
        %v1082 = vpop.xlane.xlu0 %1081
        %1083 = vadd.xlane.f32.xlu0 %v1020
        %v1084 = vpop.xlane.xlu0 %1083
        %1085 = vadd.xlane.f32.xlu0 %v1022
        %v1086 = vpop.xlane.xlu0 %1085
        %1087 = vadd.xlane.f32.xlu0 %v1024
        %v1088 = vpop.xlane.xlu0 %1087
        %1089 = vadd.xlane.f32.xlu0 %v1026
        %v1090 = vpop.xlane.xlu0 %1089
        %1091 = vadd.xlane.f32.xlu0 %v1028
        %v1092 = vpop.xlane.xlu0 %1091
        %1093 = vadd.xlane.f32.xlu0 %v1030
        %v1094 = vpop.xlane.xlu0 %1093
        %1095 = vadd.xlane.f32.xlu0 %v1032
        %v1096 = vpop.xlane.xlu0 %1095
        %1097 = vadd.xlane.f32.xlu0 %v1034
        %v1098 = vpop.xlane.xlu0 %1097
        %1099 = vadd.xlane.f32.xlu0 %v1036
        %v1100 = vpop.xlane.xlu0 %1099
        %1101 = vadd.xlane.f32.xlu0 %v1038
        %v1102 = vpop.xlane.xlu0 %1101
        %1103 = vadd.xlane.f32.xlu0 %v1040
        %v1104 = vpop.xlane.xlu0 %1103
        %1105 = vadd.xlane.f32.xlu0 %v1042
        %v1106 = vpop.xlane.xlu0 %1105
        %1107 = vadd.xlane.f32.xlu0 %v1044
        %v1108 = vpop.xlane.xlu0 %1107
        %1109 = vadd.xlane.f32.xlu0 %v1046
        %v1110 = vpop.xlane.xlu0 %1109
        %1111 = vadd.xlane.f32.xlu0 %v1048
        %v1112 = vpop.xlane.xlu0 %1111
        %1113 = vadd.xlane.f32.xlu0 %v1050
        %v1114 = vpop.xlane.xlu0 %1113
        %1115 = vadd.xlane.f32.xlu0 %v1052
        %v1116 = vpop.xlane.xlu0 %1115
        %1117 = vadd.xlane.f32.xlu0 %v1054
        %v1118 = vpop.xlane.xlu0 %1117
        %1119 = vadd.xlane.f32.xlu0 %v1056
        %v1120 = vpop.xlane.xlu0 %1119
        %1121 = vadd.xlane.f32.xlu0 %v1058
        %v1122 = vpop.xlane.xlu0 %1121
        %1123 = vadd.xlane.f32.xlu0 %v1060
        %v1124 = vpop.xlane.xlu0 %1123
        %1125 = vadd.xlane.f32.xlu0 %v1062
        %v1126 = vpop.xlane.xlu0 %1125
        %1127 = vadd.xlane.f32.xlu0 %v1064
        %v1128 = vpop.xlane.xlu0 %1127
        %1129 = vadd.xlane.f32.xlu0 %v1066
        %v1130 = vpop.xlane.xlu0 %1129
        %1131 = vadd.xlane.f32.xlu0 %v1068
        %v1132 = vpop.xlane.xlu0 %1131
        %1133 = vadd.xlane.f32.xlu0 %v1070
        %v1134 = vpop.xlane.xlu0 %1133
        %1135 = vadd.xlane.f32.xlu0 %v1072
        %v1136 = vpop.xlane.xlu0 %1135
        %1137 = vadd.xlane.f32.xlu0 %v1074
        %v1138 = vpop.xlane.xlu0 %1137
        %v1139 = vrcp.pop %v1076
        %v1140 = vrcp.pop %v1078
        %v1141 = vrcp.pop %v1080
        %v1142 = vrcp.pop %v1082
        %v1143 = vrcp.pop %v1084
        %v1144 = vrcp.pop %v1086
        %v1145 = vrcp.pop %v1088
        %v1146 = vrcp.pop %v1090
        %v1147 = vrcp.pop %v1092
        %v1148 = vrcp.pop %v1094
        %v1149 = vrcp.pop %v1096
        %v1150 = vrcp.pop %v1098
        %v1151 = vrcp.pop %v1100
        %v1152 = vrcp.pop %v1102
        %v1153 = vrcp.pop %v1104
        %v1154 = vrcp.pop %v1106
        %v1155 = vrcp.pop %v1108
        %v1156 = vrcp.pop %v1110
        %v1157 = vrcp.pop %v1112
        %v1158 = vrcp.pop %v1114
        %v1159 = vrcp.pop %v1116
        %v1160 = vrcp.pop %v1118
        %v1161 = vrcp.pop %v1120
        %v1162 = vrcp.pop %v1122
        %v1163 = vrcp.pop %v1124
        %v1164 = vrcp.pop %v1126
        %v1165 = vrcp.pop %v1128
        %v1166 = vrcp.pop %v1130
        %v1167 = vrcp.pop %v1132
        %v1168 = vrcp.pop %v1134
        %v1169 = vrcp.pop %v1136
        %v1170 = vrcp.pop %v1138
        %v1171 = vmul.f32 %v1012, %v1139
        %v1172 = vmul.f32 %v1014, %v1140
        %v1173 = vmul.f32 %v1016, %v1141
        %v1174 = vmul.f32 %v1018, %v1142
        %v1175 = vmul.f32 %v1020, %v1143
        %v1176 = vmul.f32 %v1022, %v1144
        %v1177 = vmul.f32 %v1024, %v1145
        %v1178 = vmul.f32 %v1026, %v1146
        %v1179 = vmul.f32 %v1028, %v1147
        %v1180 = vmul.f32 %v1030, %v1148
        %v1181 = vmul.f32 %v1032, %v1149
        %v1182 = vmul.f32 %v1034, %v1150
        %v1183 = vmul.f32 %v1036, %v1151
        %v1184 = vmul.f32 %v1038, %v1152
        %v1185 = vmul.f32 %v1040, %v1153
        %v1186 = vmul.f32 %v1042, %v1154
        %v1187 = vmul.f32 %v1044, %v1155
        %v1188 = vmul.f32 %v1046, %v1156
        %v1189 = vmul.f32 %v1048, %v1157
        %v1190 = vmul.f32 %v1050, %v1158
        %v1191 = vmul.f32 %v1052, %v1159
        %v1192 = vmul.f32 %v1054, %v1160
        %v1193 = vmul.f32 %v1056, %v1161
        %v1194 = vmul.f32 %v1058, %v1162
        %v1195 = vmul.f32 %v1060, %v1163
        %v1196 = vmul.f32 %v1062, %v1164
        %v1197 = vmul.f32 %v1064, %v1165
        %v1198 = vmul.f32 %v1066, %v1166
        %v1199 = vmul.f32 %v1068, %v1167
        %v1200 = vmul.f32 %v1070, %v1168
        %v1201 = vmul.f32 %v1072, %v1169
        %v1202 = vmul.f32 %v1074, %v1170
        %1203 = vst [vmem:[%s225] sm:$0xff] %v1171
        %1204 = vst [vmem:[%s225 + $0x8] sm:$0xff] %v1172
        %1205 = vst [vmem:[%s225 + $0x10] sm:$0xff] %v1173
        %1206 = vst [vmem:[%s225 + $0x18] sm:$0xff] %v1174
        %1207 = vst [vmem:[%s225 + $0x20] sm:$0xff] %v1175
        %1208 = vst [vmem:[%s225 + $0x28] sm:$0xff] %v1176
        %1209 = vst [vmem:[%s225 + $0x30] sm:$0xff] %v1177
        %1210 = vst [vmem:[%s225 + $0x38] sm:$0xff] %v1178
        %1211 = vst [vmem:[%s225 + $0x40] sm:$0xff] %v1179
        %1212 = vst [vmem:[%s225 + $0x48] sm:$0xff] %v1180
        %1213 = vst [vmem:[%s225 + $0x50] sm:$0xff] %v1181
        %1214 = vst [vmem:[%s225 + $0x58] sm:$0xff] %v1182
        %1215 = vst [vmem:[%s225 + $0x60] sm:$0xff] %v1183
        %1216 = vst [vmem:[%s225 + $0x68] sm:$0xff] %v1184
        %1217 = vst [vmem:[%s225 + $0x70] sm:$0xff] %v1185
        %1218 = vst [vmem:[%s225 + $0x78] sm:$0xff] %v1186
        %1219 = vst [vmem:[%s225 + $0x80] sm:$0xff] %v1187
        %1220 = vst [vmem:[%s225 + $0x88] sm:$0xff] %v1188
        %1221 = vst [vmem:[%s225 + $0x90] sm:$0xff] %v1189
        %1222 = vst [vmem:[%s225 + $0x98] sm:$0xff] %v1190
        %1223 = vst [vmem:[%s225 + $0xa0] sm:$0xff] %v1191
        %1224 = vst [vmem:[%s225 + $0xa8] sm:$0xff] %v1192
        %1225 = vst [vmem:[%s225 + $0xb0] sm:$0xff] %v1193
        %1226 = vst [vmem:[%s225 + $0xb8] sm:$0xff] %v1194
        %1227 = vst [vmem:[%s225 + $0xc0] sm:$0xff] %v1195
        %1228 = vst [vmem:[%s225 + $0xc8] sm:$0xff] %v1196
        %1229 = vst [vmem:[%s225 + $0xd0] sm:$0xff] %v1197
        %1230 = vst [vmem:[%s225 + $0xd8] sm:$0xff] %v1198
        %1231 = vst [vmem:[%s225 + $0xe0] sm:$0xff] %v1199
        %1232 = vst [vmem:[%s225 + $0xe8] sm:$0xff] %v1200
        %1233 = vst [vmem:[%s225 + $0xf0] sm:$0xff] %v1201
        %1234 = vst [vmem:[%s225 + $0xf8] sm:$0xff] %v1202
      $region40: #{_predict_jit.1} parent=31 // pred_fallthru
        _
      %s1235 = smul.u32 32, %s18
      %p1236 = scmp.lt.s32.totalorder %s1235, 63
      %s1237 = scalar_select %p1236, %s1235, 63
      %s1238 = smul.addr %s1237, 8
      %s1239 = scalar_lea.vmem %s3, %s1238
      // Predicated region
      $region41: #{_predict_jit.1} parent=31 // pred_check
        %p1240 = pneg %p119
      $region42: #{_predict_jit.1} parent=31 // pred_check_branch
        %1242 = sbr.rel (%p1240) target = $region44
      $region43: #{_predict_jit.1} parent=31 // pred_region
        %s1243 = smul.u32 32, %s18
      $region44: #{_predict_jit.1} parent=31 // pred_fallthru
        _
    $region32: #{_predict_jit.1} parent=5 // pred_fallthru
      _
    %p1244 = scmp.le.s32.totalorder 2, %s9
    // Predicated region
    $region45: #{_predict_jit.1} parent=5 // pred_check
      %p1245 = pneg %p1244
    $region46: #{_predict_jit.1} parent=5 // pred_check_branch
      %1247 = sbr.rel (%p1245) target = $region48
    $region47: #{_predict_jit.1} parent=5 // pred_region
      %s1248 = ssub.s32 %s9, 2
      // Predicated region
      $region49: #{_predict_jit.1} parent=47 // pred_check
        %p1249 = pneg %p125
      $region50: #{_predict_jit.1} parent=47 // pred_check_branch
        %1251 = sbr.rel (%p1249) target = $region52
      $region51: #{_predict_jit.1} parent=47 // pred_region
        %s1252 = smul.u32 32, %s20
        %p1253 = scmp.lt.s32.totalorder %s1252, 63
        %s1254 = scalar_select %p1253, %s1252, 63
        %s1255 = smul.addr %s1254, 8
        %s1256 = scalar_lea.vmem %s3, %s1255
      $region52: #{_predict_jit.1} parent=47 // pred_fallthru
        _
    $region48: #{_predict_jit.1} parent=5 // pred_fallthru
      _
  $region6: #{_predict_jit.1} parent=0 // loop_footer
    %s13 = sadd.s32 1, %s9
  $region7: #{_predict_jit.1} parent=0 // loop_footer_branch
    %8 = sbr.rel target = $region3
  $region8: #{_predict_jit.1} parent=0 // loop_exit
    _

</llo_original>
